<compile_context>
chip_gen: v7x
topology: tpu7x:2x2x1
jax: 0.10.0
libtpu: 0.0.40
codegen_flags: <defaults>
</compile_context>

<pallas_src>
import math
from functools import partial

import jax
import jax.numpy as jnp
from jax.experimental import pallas as pl
from jax.experimental.pallas import tpu as pltpu

_LANE = 128

# ---- fused sin/cos (shared range reduction, cephes-style f32 minimax polys) ----
_TWO_OVER_PI = 0.6366197723675814
# 3-term Cody-Waite split of pi/2 (products n*DPk are exact in f32 for |n| < 2**16)
_DP1 = 1.5703125
_DP2 = 4.837512969970703125e-4
_DP3 = 7.54978995489188216e-8
_SIN_C0 = -1.9515295891e-4
_SIN_C1 = 8.3321608736e-3
_SIN_C2 = -1.6666654611e-1
_COS_C0 = 2.443315711809948e-5
_COS_C1 = -1.388731625493765e-3
_COS_C2 = 4.166664568298827e-2


def _sincos(x):
    """Return (sin(x), cos(x)) with one shared range reduction (f32)."""
    n_f = jnp.floor(x * _TWO_OVER_PI + 0.5)
    q = n_f.astype(jnp.int32)
    r = ((x - n_f * _DP1) - n_f * _DP2) - n_f * _DP3   # |r| <= pi/4
    z = r * r
    sin_r = r + r * z * ((_SIN_C0 * z + _SIN_C1) * z + _SIN_C2)
    cos_r = (1.0 - 0.5 * z) + z * z * ((_COS_C0 * z + _COS_C1) * z + _COS_C2)
    swap = (q & 1) == 1
    s = jnp.where(swap, cos_r, sin_r)
    c = jnp.where(swap, sin_r, cos_r)
    s = jnp.where((q & 2) == 2, -s, s)
    c = jnp.where(((q + 1) & 2) == 2, -c, c)
    return s, c


def _grff_kernel(v_ref, b_ref, o_ref, *, half: int):
    # 2*pi is already folded into b; K is tiny so the matmul rides free on the MXU.
    proj = jnp.dot(v_ref[...], b_ref[...], preferred_element_type=jnp.float32)
    s, c = _sincos(proj)
    o_ref[:, :half] = c.astype(o_ref.dtype)
    o_ref[:, half:] = s.astype(o_ref.dtype)


def _choose_tm(n: int, input_dim: int, half_pad: int, out_itemsize: int) -> int:
    # VMEM per tile row: double-buffered v block + double-buffered out block
    # + f32 intermediates of the sincos (proj, r, z, polys, ...). B is tiny.
    bytes_per_row = (2 * input_dim * 4
                     + 2 * 2 * half_pad * out_itemsize
                     + 8 * half_pad * 4)
    budget = 16 * 1024 * 1024              # fits every chip's scoped-VMEM default
    tm = max(8, budget // max(bytes_per_row, 1))
    tm = min(tm, 1024)                     # per-step overhead well amortized here
    tm = min(tm, pl.cdiv(n, 2))            # >=2 grid steps -> both v7x TCs get work
    tm = max(8, (tm // 8) * 8)             # sublane alignment
    return int(tm)


def gaussian_random_fourier_features(v: jax.Array, B: jax.Array) -> jax.Array:
    """v: (..., input_dim), B: (input_dim, embed_dim//2) -> (..., embed_dim)."""
    input_dim, half = B.shape
    embed_dim = 2 * half
    out_dtype = v.dtype

    # Fold the 2*pi scale into the tiny constant projection matrix (f32).
    B2 = (2.0 * math.pi) * B.astype(jnp.float32)

    # Lane-dense output: pad B's columns to a multiple of 128 only when it pays off.
    if half >= _LANE and half % _LANE != 0:
        half_pad = pl.cdiv(half, _LANE) * _LANE
        B2 = jnp.pad(B2, ((0, 0), (0, half_pad - half)))
    else:
        half_pad = half
    embed_pad = 2 * half_pad

    orig_shape = v.shape
    assert orig_shape[-1] == input_dim
    v2d = v.reshape(-1, input_dim)
    n = v2d.shape[0]

    tm = _choose_tm(n, input_dim, half_pad, jnp.dtype(out_dtype).itemsize)
    grid = pl.cdiv(n, tm)   # ragged last block: padded loads, dropped stores

    cost = pl.CostEstimate(
        flops=2 * n * input_dim * half_pad,
        transcendentals=n * embed_pad,
        bytes_accessed=(n * input_dim * v2d.dtype.itemsize
                        + input_dim * half_pad * 4
                        + n * embed_pad * jnp.dtype(out_dtype).itemsize),
    )

    out = pl.pallas_call(
        partial(_grff_kernel, half=half_pad),
        out_shape=jax.ShapeDtypeStruct((n, embed_pad), out_dtype),
        grid_spec=pltpu.PrefetchScalarGridSpec(
            num_scalar_prefetch=0,
            grid=(grid,),
            in_specs=[
                pl.BlockSpec((tm, input_dim), lambda i: (i, 0)),
                pl.BlockSpec((input_dim, half_pad), lambda i: (0, 0)),
            ],
            out_specs=pl.BlockSpec((tm, embed_pad), lambda i: (i, 0)),
        ),
        compiler_params=pltpu.CompilerParams(
            dimension_semantics=("parallel",),
            vmem_limit_bytes=32 * 1024 * 1024,
        ),
        cost_estimate=cost,
    )(v2d, B2)

    if half_pad != half:
        out = jnp.concatenate(
            [out[:, :half], out[:, half_pad:half_pad + half]], axis=-1)
    return out.reshape(*orig_shape[:-1], embed_dim)


def reference(v, B):
    proj = 2.0 * math.pi * (v @ B)
    return jnp.concatenate([jnp.cos(proj), jnp.sin(proj)], axis=-1)


if __name__ == "__main__":
    key = jax.random.PRNGKey(0)
    k1, k2, k3, k4 = jax.random.split(key, 4)

    # Test 1: module defaults (embed_dim=64, input_dim=4, sigma=1.0), input (2, 8, 4)
    embed_dim, input_dim, sigma = 64, 4, 1.0
    B1 = jax.random.normal(k1, (input_dim, embed_dim // 2), dtype=jnp.float32) * sigma
    v1 = jax.random.normal(k2, (2, 8, input_dim), dtype=jnp.float32)
    out1 = jax.block_until_ready(gaussian_random_fourier_features(v1, B1))
    ref1 = reference(v1, B1)
    assert out1.shape == (2, 8, embed_dim), out1.shape
    assert jnp.allclose(out1, ref1, atol=5e-5, rtol=1e-5), float(
        jnp.max(jnp.abs(out1 - ref1)))

    # Test 2: ragged batch (n % tm != 0) + lane-padded half (half=160, not a 128 multiple)
    B2_ = jax.random.normal(k3, (3, 160), dtype=jnp.float32) * 0.7
    v2_ = jax.random.normal(k4, (20, 3), dtype=jnp.float32)
    out2 = jax.block_until_ready(gaussian_random_fourier_features(v2_, B2_))
    ref2 = reference(v2_, B2_)
    assert out2.shape == (20, 320), out2.shape
    assert jnp.allclose(out2, ref2, atol=5e-5, rtol=1e-5), float(
        jnp.max(jnp.abs(out2 - ref2)))

    print("KERNEL_OK")
</pallas_src>

<mosaic_0001>
module attributes {stable_mosaic.version = 11 : i64} {
  func.func @_grff_kernel(%arg0: i32, %arg1: memref<8x4xf32, #tpu.memory_space<vmem>>, %arg2: memref<4x32xf32, #tpu.memory_space<vmem>>, %arg3: memref<8x64xf32, #tpu.memory_space<vmem>>) attributes {dimension_semantics = [#tpu.dimension_semantics<parallel>], iteration_bounds = array<i64: 2>, scalar_prefetch = 0 : i64, scratch_operands = 0 : i64, tpu.core_type = #tpu.core_type<tc>, window_params = [{transform_indices = @transform_0, window_bounds = array<i64: 8, 4>}, {pipeline_mode = #tpu.pipeline_mode<synchronous>, transform_indices = @transform_1, window_bounds = array<i64: 4, 32>}, {transform_indices = @transform_2, window_bounds = array<i64: 8, 64>}]} {
    %c0 = arith.constant 0 : index
    %c0_0 = arith.constant 0 : index
    %0 = vector.load %arg1[%c0, %c0_0] : memref<8x4xf32, #tpu.memory_space<vmem>>, vector<8x4xf32>
    %c0_1 = arith.constant 0 : index
    %c0_2 = arith.constant 0 : index
    %1 = vector.load %arg2[%c0_1, %c0_2] : memref<4x32xf32, #tpu.memory_space<vmem>>, vector<4x32xf32>
    %cst = arith.constant dense<0.000000e+00> : vector<8x32xf32>
    %2 = tpu.matmul %0, %1, %cst {dimension_numbers = #tpu.dot_dimension_numbers<[1], [0], [0], [1], [0, 0, 1, 1], [], []>} : vector<8x4xf32>, vector<4x32xf32>, vector<8x32xf32> -> vector<8x32xf32>
    %cst_3 = arith.constant 0.636619746 : f32
    %3 = vector.broadcast %cst_3 : f32 to vector<8x32xf32>
    %4 = arith.mulf %2, %3 : vector<8x32xf32>
    %cst_4 = arith.constant 5.000000e-01 : f32
    %5 = vector.broadcast %cst_4 : f32 to vector<8x32xf32>
    %6 = arith.addf %4, %5 : vector<8x32xf32>
    %7 = math.floor %6 : vector<8x32xf32>
    %8 = arith.fptosi %7 : vector<8x32xf32> to vector<8x32xi32>
    %cst_5 = arith.constant 1.5703125 : f32
    %9 = vector.broadcast %cst_5 : f32 to vector<8x32xf32>
    %10 = arith.mulf %7, %9 : vector<8x32xf32>
    %11 = arith.subf %2, %10 : vector<8x32xf32>
    %cst_6 = arith.constant 4.83751297E-4 : f32
    %12 = vector.broadcast %cst_6 : f32 to vector<8x32xf32>
    %13 = arith.mulf %7, %12 : vector<8x32xf32>
    %14 = arith.subf %11, %13 : vector<8x32xf32>
    %cst_7 = arith.constant 7.549790e-08 : f32
    %15 = vector.broadcast %cst_7 : f32 to vector<8x32xf32>
    %16 = arith.mulf %7, %15 : vector<8x32xf32>
    %17 = arith.subf %14, %16 : vector<8x32xf32>
    %18 = arith.mulf %17, %17 : vector<8x32xf32>
    %19 = arith.mulf %17, %18 : vector<8x32xf32>
    %cst_8 = arith.constant -1.95152956E-4 : f32
    %20 = vector.broadcast %cst_8 : f32 to vector<8x32xf32>
    %21 = arith.mulf %20, %18 : vector<8x32xf32>
    %cst_9 = arith.constant 0.00833216123 : f32
    %22 = vector.broadcast %cst_9 : f32 to vector<8x32xf32>
    %23 = arith.addf %21, %22 : vector<8x32xf32>
    %24 = arith.mulf %23, %18 : vector<8x32xf32>
    %cst_10 = arith.constant -0.166666552 : f32
    %25 = vector.broadcast %cst_10 : f32 to vector<8x32xf32>
    %26 = arith.addf %24, %25 : vector<8x32xf32>
    %27 = arith.mulf %19, %26 : vector<8x32xf32>
    %28 = arith.addf %17, %27 : vector<8x32xf32>
    %cst_11 = arith.constant 5.000000e-01 : f32
    %29 = vector.broadcast %cst_11 : f32 to vector<8x32xf32>
    %30 = arith.mulf %29, %18 : vector<8x32xf32>
    %cst_12 = arith.constant 1.000000e+00 : f32
    %31 = vector.broadcast %cst_12 : f32 to vector<8x32xf32>
    %32 = arith.subf %31, %30 : vector<8x32xf32>
    %33 = arith.mulf %18, %18 : vector<8x32xf32>
    %cst_13 = arith.constant 2.44331568E-5 : f32
    %34 = vector.broadcast %cst_13 : f32 to vector<8x32xf32>
    %35 = arith.mulf %34, %18 : vector<8x32xf32>
    %cst_14 = arith.constant -0.00138873165 : f32
    %36 = vector.broadcast %cst_14 : f32 to vector<8x32xf32>
    %37 = arith.addf %35, %36 : vector<8x32xf32>
    %38 = arith.mulf %37, %18 : vector<8x32xf32>
    %cst_15 = arith.constant 0.0416666456 : f32
    %39 = vector.broadcast %cst_15 : f32 to vector<8x32xf32>
    %40 = arith.addf %38, %39 : vector<8x32xf32>
    %41 = arith.mulf %33, %40 : vector<8x32xf32>
    %42 = arith.addf %32, %41 : vector<8x32xf32>
    %c1_i32 = arith.constant 1 : i32
    %43 = vector.broadcast %c1_i32 : i32 to vector<8x32xi32>
    %44 = arith.andi %8, %43 : vector<8x32xi32>
    %c1_i32_16 = arith.constant 1 : i32
    %45 = vector.broadcast %c1_i32_16 : i32 to vector<8x32xi32>
    %46 = arith.cmpi eq, %44, %45 : vector<8x32xi32>
    %47 = arith.select %46, %42, %28 : vector<8x32xi1>, vector<8x32xf32>
    %48 = arith.select %46, %28, %42 : vector<8x32xi1>, vector<8x32xf32>
    %c2_i32 = arith.constant 2 : i32
    %49 = vector.broadcast %c2_i32 : i32 to vector<8x32xi32>
    %50 = arith.andi %8, %49 : vector<8x32xi32>
    %c2_i32_17 = arith.constant 2 : i32
    %51 = vector.broadcast %c2_i32_17 : i32 to vector<8x32xi32>
    %52 = arith.cmpi eq, %50, %51 : vector<8x32xi32>
    %cst_18 = arith.constant 0.000000e+00 : f32
    %53 = vector.broadcast %cst_18 : f32 to vector<8x32xf32>
    %54 = arith.subf %53, %47 : vector<8x32xf32>
    %55 = arith.select %52, %54, %47 : vector<8x32xi1>, vector<8x32xf32>
    %c1_i32_19 = arith.constant 1 : i32
    %56 = vector.broadcast %c1_i32_19 : i32 to vector<8x32xi32>
    %57 = arith.addi %8, %56 : vector<8x32xi32>
    %c2_i32_20 = arith.constant 2 : i32
    %58 = vector.broadcast %c2_i32_20 : i32 to vector<8x32xi32>
    %59 = arith.andi %57, %58 : vector<8x32xi32>
    %c2_i32_21 = arith.constant 2 : i32
    %60 = vector.broadcast %c2_i32_21 : i32 to vector<8x32xi32>
    %61 = arith.cmpi eq, %59, %60 : vector<8x32xi32>
    %cst_22 = arith.constant 0.000000e+00 : f32
    %62 = vector.broadcast %cst_22 : f32 to vector<8x32xf32>
    %63 = arith.subf %62, %48 : vector<8x32xf32>
    %64 = arith.select %61, %63, %48 : vector<8x32xi1>, vector<8x32xf32>
    %c0_23 = arith.constant 0 : index
    %c0_24 = arith.constant 0 : index
    %65 = vector.load %arg3[%c0_23, %c0_24] : memref<8x64xf32, #tpu.memory_space<vmem>>, vector<8x32xf32>
    tpu.vector_store %arg3[%c0_23, %c0_24], %64 {strides = array<i32>} : memref<8x64xf32, #tpu.memory_space<vmem>>, vector<8x32xf32>,
    %c0_25 = arith.constant 0 : index
    %c32 = arith.constant 32 : index
    %66 = vector.load %arg3[%c0_25, %c32] : memref<8x64xf32, #tpu.memory_space<vmem>>, vector<8x32xf32>
    tpu.vector_store %arg3[%c0_25, %c32], %55 {strides = array<i32>} : memref<8x64xf32, #tpu.memory_space<vmem>>, vector<8x32xf32>,
    return
  }
  func.func @transform_0(%arg0: i32) -> (i32, i32) {
    %c0_i32 = arith.constant 0 : i32
    %c0_i32_0 = arith.constant 0 : i32
    return %arg0, %c0_i32 : i32, i32
  }
  func.func @transform_1(%arg0: i32) -> (i32, i32) {
    %c0_i32 = arith.constant 0 : i32
    %c0_i32_0 = arith.constant 0 : i32
    %c0_i32_1 = arith.constant 0 : i32
    return %c0_i32, %c0_i32_0 : i32, i32
  }
  func.func @transform_2(%arg0: i32) -> (i32, i32) {
    %c0_i32 = arith.constant 0 : i32
    %c0_i32_0 = arith.constant 0 : i32
    return %arg0, %c0_i32 : i32, i32
  }
}

</mosaic_0001>

<llo_original>
// kernel: tpu_custom_call.1
$region0: #{tpu_custom_call.1}
  #allocation0 [shape = 'u32[]', space=smem, size = 0x4, offset = 0x4, fixed_abs, tag = 'smem constant byte address 0x4 - core index']
  #allocation1 [shape = 'u32[144,128]{1,0:T(1,128)}', space=vmem, size = 0x12000, scoped, tag = 'internal scratch']
  %s0 = inlined_call_operand.vmem [shape: f32[16,4], index: 0, kind: input, shape index: {}]
  %s1 = inlined_call_operand.vmem [shape: f32[4,32], index: 1, kind: input, shape index: {}]
  %s2 = inlined_call_operand.hbm [shape: f32[16,64], index: 2, kind: output, shape index: {}]
  %s3 = sld [smem:[#allocation0]]
  $region41: #{tpu_custom_call.1} parent=0
    _
  %s5 = ssub.s32 1, %s3
  %s6 = scalar_select 0, %s5, %s3
  $region1: #{tpu_custom_call.1} parent=0
    #allocation2 [shape = 'u8[8192]{0}', space=vmem, size = 0x2000, scoped, tag = 'output window, operand 0']
    #allocation3 [shape = 's32[2]{0}', space=sflag, size = 0x8, scoped, tag = 'scoped memory for tpu_custom_call.1']
    %7 = vsyncpa [#allocation3], 0
    %s8 = scalar_lea.sflag [#allocation3], 1
    %9 = vsyncpa %s8, 0
    loop: start=0, step=1, limit=4
    $region2: #{tpu_custom_call.1} parent=1 // loop_pre_header
      _
    $region3: #{tpu_custom_call.1} parent=1 // loop_header
      %s11 = sphi 0, %s15
      %p12 = scmp.ge.s32.totalorder %s11, 4
      %s21 = sphi 0, %s23
      %s24 = sphi 0, %s21
      %s25 = sphi 0, %s24
      %s41 = sphi 0, %s25
      %s45 = sphi 0, %s45
      %s47 = sphi 0, %s45
      %s48 = sphi 0, %s47
      %s62 = sphi 0, %s48
      %s68 = sphi 0, %s70
      %s71 = sphi 0, %s68
      %s72 = sphi 0, %s71
      %s88 = sphi 0, %s72
    $region4: #{tpu_custom_call.1} parent=1 // loop_header_branch
      %14 = sbr.rel (%p12) target = $region8
    $region5: #{tpu_custom_call.1} parent=1 // loop_body
      %s16 = ssub.s32 %s11, 1
      %s17 = ssub.s32 %s11, 2
      %s18 = sadd.s32 %s11, 1
      %s19 = ssub.s32 %s11, %s18
      %p20 = scmp.eq.s32.totalorder %s19, 0
      %s22 = sadd.s32 %s21, 1
      %s23 = scalar_select %p20, %s21, %s22
      %p26 = pneg %p20
      %p27 = scmp.eq.s32.totalorder %s11, 1
      %p28 = por %p26, %p27
      %p29 = scmp.ne.s32.totalorder %s21, %s24
      %p30 = scmp.eq.s32.totalorder %s11, 0
      %p31 = por %p29, %p30
      %p32 = scmp.ne.s32.totalorder %s21, %s24
      %p33 = scmp.eq.s32.totalorder %s16, 1
      %p34 = por %p32, %p33
      %p35 = scmp.ne.s32.totalorder %s24, %s25
      %p36 = scmp.eq.s32.totalorder %s16, 0
      %p37 = por %p35, %p36
      %p38 = scmp.ne.s32.totalorder %s24, %s25
      %p39 = scmp.eq.s32.totalorder %s17, 1
      %p40 = por %p38, %p39
      %p42 = scmp.ne.s32.totalorder %s25, %s41
      %p43 = scmp.eq.s32.totalorder %s17, 0
      %p44 = por %p42, %p43
      %s46 = sadd.s32 %s45, 1
      %p49 = scmp.eq.s32.totalorder %s11, 1
      %p50 = scmp.ne.s32.totalorder %s45, %s47
      %p51 = scmp.eq.s32.totalorder %s11, 0
      %p52 = por %p50, %p51
      %p53 = scmp.ne.s32.totalorder %s45, %s47
      %p54 = scmp.eq.s32.totalorder %s16, 1
      %p55 = por %p53, %p54
      %p56 = scmp.ne.s32.totalorder %s47, %s48
      %p57 = scmp.eq.s32.totalorder %s16, 0
      %p58 = por %p56, %p57
      %p59 = scmp.ne.s32.totalorder %s47, %s48
      %p60 = scmp.eq.s32.totalorder %s17, 1
      %p61 = por %p59, %p60
      %p63 = scmp.ne.s32.totalorder %s48, %s62
      %p64 = scmp.eq.s32.totalorder %s17, 0
      %p65 = por %p63, %p64
      %s66 = ssub.s32 %s11, %s18
      %p67 = scmp.eq.s32.totalorder %s66, 0
      %s69 = sadd.s32 %s68, 1
      %s70 = scalar_select %p67, %s68, %s69
      %p73 = pneg %p67
      %p74 = scmp.eq.s32.totalorder %s11, 1
      %p75 = por %p73, %p74
      %p76 = scmp.ne.s32.totalorder %s68, %s71
      %p77 = scmp.eq.s32.totalorder %s11, 0
      %p78 = por %p76, %p77
      %p79 = scmp.ne.s32.totalorder %s68, %s71
      %p80 = scmp.eq.s32.totalorder %s16, 1
      %p81 = por %p79, %p80
      %p82 = scmp.ne.s32.totalorder %s71, %s72
      %p83 = scmp.eq.s32.totalorder %s16, 0
      %p84 = por %p82, %p83
      %p85 = scmp.ne.s32.totalorder %s71, %s72
      %p86 = scmp.eq.s32.totalorder %s17, 1
      %p87 = por %p85, %p86
      %p89 = scmp.ne.s32.totalorder %s72, %s88
      %p90 = scmp.eq.s32.totalorder %s17, 0
      %p91 = por %p89, %p90
      %p92 = scmp.le.s32.totalorder 1, %s11
      %p93 = scmp.lt.s32.totalorder %s11, 3
      %p94 = pnand %p92, %p93
      %p95 = pneg %p94
      // Predicated region
      $region9: #{tpu_custom_call.1} parent=5 // pred_check
        _
      $region10: #{tpu_custom_call.1} parent=5 // pred_check_branch
        %97 = sbr.rel (%p94) target = $region12
      $region11: #{tpu_custom_call.1} parent=5 // pred_region
        %s98 = ssub.s32 %s11, 1
        // Predicated region
        $region13: #{tpu_custom_call.1} parent=11 // pred_check
          %p99 = pneg %p58
        $region14: #{tpu_custom_call.1} parent=11 // pred_check_branch
          %101 = sbr.rel (%p99) target = $region16
        $region15: #{tpu_custom_call.1} parent=11 // pred_region
          _
        $region16: #{tpu_custom_call.1} parent=11 // pred_fallthru
          _
      $region12: #{tpu_custom_call.1} parent=5 // pred_fallthru
        _
      %p102 = scmp.lt.s32.totalorder %s11, 2
      // Predicated region
      $region17: #{tpu_custom_call.1} parent=5 // pred_check
        %p103 = pneg %p102
      $region18: #{tpu_custom_call.1} parent=5 // pred_check_branch
        %105 = sbr.rel (%p103) target = $region20
      $region19: #{tpu_custom_call.1} parent=5 // pred_region
        // Predicated region
        $region21: #{tpu_custom_call.1} parent=19 // pred_check
          %p106 = pneg %p31
        $region22: #{tpu_custom_call.1} parent=19 // pred_check_branch
          %108 = sbr.rel (%p106) target = $region24
        $region23: #{tpu_custom_call.1} parent=19 // pred_region
          %p109 = scmp.lt.s32.totalorder %s11, 1
          %s110 = scalar_select %p109, %s11, 1
          %s111 = smul.addr %s110, 8
          %s112 = scalar_lea.vmem %s0, %s111
        $region24: #{tpu_custom_call.1} parent=19 // pred_fallthru
          _
      $region20: #{tpu_custom_call.1} parent=5 // pred_fallthru
        _
      %p113 = scmp.le.s32.totalorder 1, %s11
      %p114 = scmp.lt.s32.totalorder %s11, 3
      %p115 = pnand %p113, %p114
      %p116 = pneg %p115
      // Predicated region
      $region25: #{tpu_custom_call.1} parent=5 // pred_check
        _
      $region26: #{tpu_custom_call.1} parent=5 // pred_check_branch
        %118 = sbr.rel (%p115) target = $region28
      $region27: #{tpu_custom_call.1} parent=5 // pred_region
        %s119 = ssub.s32 %s11, 1
        %p120 = scmp.lt.s32.totalorder %s16, 1
        %s121 = scalar_select %p120, %s16, 1
        %s122 = smul.addr %s121, 8
        %s123 = scalar_lea.vmem %s0, %s122
        %p124 = pneg %p37
        %p125 = pneg %p34
        %p126 = pneg %p58
        %p127 = pneg %p55
        %p128 = pneg %p84
        %p129 = pneg %p81
        %s130 = sand.u32 %s71, 1
        %s131 = scalar_lea.sflag [#allocation3], %s130
        %s132 = sand.u32 %s71, 1
        %s133 = smul.addr %s132, 8
        %s134 = scalar_lea.vmem [#allocation2], %s133
        %p135 = scmp.lt.s32.totalorder %s16, 1
        %s136 = scalar_select %p135, %s16, 1
        %s137 = smul.addr %s136, 8
        %s138 = scalar_lea.vmem %s0, %s137
        %v139 = vld [vmem:[%s138] sm:$0xff]
        %v140 = vld [vmem:[%s1] sm:$0xf]
        %vm141 = vcmask 31744
        %v143 = vsel %vm141, %v139, 0
        %vm145 = vcmask 1043456
        %v147 = vsel %vm145, %v140, 0
        %149 = vmatprep.subr.mxu0 0.0
        %150 = vmatpush1.msra.mxu0 %v147
        %151 = vmatprep.subr.mxu0 0.0
        %152 = vmatpush1.msra.mxu0 0.0
        %153 = vmatprep.subr.mxu0 0.0
        %154 = vmatpush1.msra.mxu0 0.0
        %155 = vmatprep.subr.mxu0 0.0
        %156 = vmatpush1.msra.mxu0 0.0
        %157 = vmatprep.subr.mxu0 0.0
        %158 = vmatpush1.msra.mxu0 0.0
        %159 = vmatprep.subr.mxu0 0.0
        %160 = vmatpush1.msra.mxu0 0.0
        %161 = vmatprep.subr.mxu0 0.0
        %162 = vmatpush1.msra.mxu0 0.0
        %163 = vmatprep.subr.mxu0 0.0
        %164 = vmatpush1.msra.mxu0 0.0
        %165 = vmatprep.subr.mxu0 0.0
        %166 = vmatpush1.msra.mxu0 0.0
        %167 = vmatprep.subr.mxu0 0.0
        %168 = vmatpush1.msra.mxu0 0.0
        %169 = vmatprep.subr.mxu0 0.0
        %170 = vmatpush1.msra.mxu0 0.0
        %171 = vmatprep.subr.mxu0 0.0
        %172 = vmatpush1.msra.mxu0 0.0
        %173 = vmatprep.subr.mxu0 0.0
        %174 = vmatpush1.msra.mxu0 0.0
        %175 = vmatprep.subr.mxu0 0.0
        %176 = vmatpush1.msra.mxu0 0.0
        %177 = vmatprep.subr.mxu0 0.0
        %178 = vmatpush1.msra.mxu0 0.0
        %179 = vmatprep.subr.mxu0 0.0
        %180 = vmatpush1.msra.mxu0 0.0
        %181 = vmatprep.subr.mxu0 0.0
        %182 = vmatpush1.msra.mxu0 0.0
        %183 = vmatprep.subr.mxu0 0.0
        %184 = vmatpush1.msra.mxu0 0.0
        %185 = vmatprep.subr.mxu0 0.0
        %186 = vmatpush1.msra.mxu0 0.0
        %187 = vmatprep.subr.mxu0 0.0
        %188 = vmatpush1.msra.mxu0 0.0
        %189 = vmatprep.subr.mxu0 0.0
        %190 = vmatpush1.msra.mxu0 0.0
        %191 = vmatprep.subr.mxu0 0.0
        %192 = vmatpush1.msra.mxu0 0.0
        %193 = vmatprep.subr.mxu0 0.0
        %194 = vmatpush1.msra.mxu0 0.0
        %195 = vmatprep.subr.mxu0 0.0
        %196 = vmatpush1.msra.mxu0 0.0
        %197 = vmatprep.subr.mxu0 0.0
        %198 = vmatpush1.msra.mxu0 0.0
        %199 = vmatprep.subr.mxu0 0.0
        %200 = vmatpush1.msra.mxu0 0.0
        %201 = vmatprep.subr.mxu0 0.0
        %202 = vmatpush1.msra.mxu0 0.0
        %203 = vmatprep.subr.mxu0 0.0
        %204 = vmatpush1.msra.mxu0 0.0
        %205 = vmatprep.subr.mxu0 0.0
        %206 = vmatpush1.msra.mxu0 0.0
        %207 = vmatprep.subr.mxu0 0.0
        %208 = vmatpush1.msra.mxu0 0.0
        %209 = vmatprep.subr.mxu0 0.0
        %210 = vmatpush1.msra.mxu0 0.0
        %211 = vmatprep.subr.mxu0 0.0
        %212 = vmatpush1.msra.mxu0 0.0
        %213 = vmatprep.mubr.f32.mxu0 0.0
        %214 = vmatmul.mubr.f32.gmra.mrb[0].mxu0 %v143
        %v215 = vpop.f32.mrb[0].mxu0
        %v216 = vadd.f32 0.0, %v215
        %v217 = vpop.f32.mrb[0].mxu0
        %218 = vdwg.mxu0
        %v219 = vmul.f32 %v216, 0.63661975
        %v220 = vadd.f32 %v219, 0.5
        %v221 = vfloor.f32 %v220
        %v222 = vcvt.f32.s32.to.zero.pseudo %v221
        %v223 = vmul.f32 %v221, 1.5703125
        %v224 = vsub.f32 %v216, %v223
        %v225 = vmul.f32 %v221, 0.0004837513
        %v226 = vsub.f32 %v224, %v225
        %v227 = vmul.f32 %v221, 7.54979e-08
        %v228 = vsub.f32 %v226, %v227
        %v229 = vmul.f32 %v228, %v228
        %v230 = vmul.f32 %v228, %v229
        %v231 = vmul.f32 %v229, -0.00019515296
        %v232 = vadd.f32 %v231, 0.008332161
        %v233 = vmul.f32 %v232, %v229
        %v234 = vadd.f32 %v233, -0.16666655
        %v235 = vmul.f32 %v230, %v234
        %v236 = vadd.f32 %v228, %v235
        %v237 = vmul.f32 %v229, 0.5
        %v238 = vsub.f32 1.0, %v237
        %v239 = vmul.f32 %v229, %v229
        %v240 = vmul.f32 %v229, 2.4433157e-05
        %v241 = vadd.f32 %v240, -0.0013887316
        %v242 = vmul.f32 %v241, %v229
        %v243 = vadd.f32 %v242, 0.041666646
        %v244 = vmul.f32 %v239, %v243
        %v245 = vadd.f32 %v238, %v244
        %v246 = vand.u32 %v222, 1
        %vm247 = vcmp.eq.s32.totalorder %v246, 1
        %v248 = vsel %vm247, %v245, %v236
        %v249 = vsel %vm247, %v236, %v245
        %v250 = vand.u32 %v222, 2
        %vm251 = vcmp.eq.s32.totalorder %v250, 2
        %v252 = vsub.f32 0.0, %v248
        %v253 = vsel %vm251, %v252, %v248
        %v254 = vadd.s32 %v222, 1
        %v255 = vand.u32 %v254, 2
        %vm256 = vcmp.eq.s32.totalorder %v255, 2
        %v257 = vsub.f32 0.0, %v249
        %v258 = vsel %vm256, %v257, %v249
        %vm259 = vcmask 261120
        %260 = vst.msk [vmem:[%s134] sm:$0xff] %vm259, %v258
        %262 = vrot.lane.b32.xlu0 %v253, 32
        %v263 = vpop.permute.xlu0 %262
        %vm265 = vcmask 523520
        %266 = vst.msk [vmem:[%s134] sm:$0xff] %vm265, %v263
        %s267 = sand.u32 %s71, 1
        %s268 = scalar_lea.sflag [#allocation3], %s267
        %s269 = sand.u32 %s71, 1
        %s270 = smul.addr %s269, 8
        %s271 = scalar_lea.vmem [#allocation2], %s270
        // Predicated region
        $region29: #{tpu_custom_call.1} parent=27 // pred_check
          %p272 = pneg %p81
        $region30: #{tpu_custom_call.1} parent=27 // pred_check_branch
          %274 = sbr.rel (%p272) target = $region32
        $region31: #{tpu_custom_call.1} parent=27 // pred_region
          %s276 = ssub.s32 128, 128
          %277 = vsyncadd %s268, %s276
          %s278 = smul.addr %s16, 128
          %s279 = scalar_lea.hbm %s2, %s278
          %s281 = sshll.u32 %s271, 4
          %s282 = int_to_ptr.vmem [resolvable:$true] %s281
          %284 = dma.vmem_to_hbm [thread:$0]  %s282, 128, %s279, %s268
        $region32: #{tpu_custom_call.1} parent=27 // pred_fallthru
          _
      $region28: #{tpu_custom_call.1} parent=5 // pred_fallthru
        _
      %p285 = scmp.le.s32.totalorder 2, %s11
      // Predicated region
      $region33: #{tpu_custom_call.1} parent=5 // pred_check
        %p286 = pneg %p285
      $region34: #{tpu_custom_call.1} parent=5 // pred_check_branch
        %288 = sbr.rel (%p286) target = $region36
      $region35: #{tpu_custom_call.1} parent=5 // pred_region
        %s289 = ssub.s32 %s11, 2
        // Predicated region
        $region37: #{tpu_custom_call.1} parent=35 // pred_check
          %p290 = pneg %p87
        $region38: #{tpu_custom_call.1} parent=35 // pred_check_branch
          %292 = sbr.rel (%p290) target = $region40
        $region39: #{tpu_custom_call.1} parent=35 // pred_region
          %s293 = sand.u32 %s72, 1
          %s294 = scalar_lea.sflag [#allocation3], %s293
          %s295 = sand.u32 %s72, 1
          %s296 = smul.addr %s295, 8
          %s297 = scalar_lea.vmem [#allocation2], %s296
          %298 = dma.done %s294, 128
        $region40: #{tpu_custom_call.1} parent=35 // pred_fallthru
          _
      $region36: #{tpu_custom_call.1} parent=5 // pred_fallthru
        _
    $region6: #{tpu_custom_call.1} parent=1 // loop_footer
      %s15 = sadd.s32 1, %s11
    $region7: #{tpu_custom_call.1} parent=1 // loop_footer_branch
      %10 = sbr.rel target = $region3
    $region8: #{tpu_custom_call.1} parent=1 // loop_exit
      _
    %299 = vsyncpa [#allocation3], 1
    %s300 = scalar_lea.sflag [#allocation3], 1
    %301 = vsyncpa %s300, 1

</llo_original>
